<compile_context>
chip_gen: v7x
topology: tpu7x:2x2x1
jax: 0.10.0
libtpu: 0.0.40
codegen_flags: <defaults>
</compile_context>

<pallas_src>
import functools
import math

import jax
import jax.numpy as jnp
from jax import lax
from jax.experimental import pallas as pl
from jax.experimental.pallas import tpu as pltpu


def _cdiv(a, b):
    return -(-a // b)


# ---------------------------------------------------------------------------
# Kernel: full morphology loop on one lane/sublane-packed block of images.
# ---------------------------------------------------------------------------
def _skeleton_kernel(img_ref, skel_ref, *, n_iter, eps, ksize, img_h, img_w,
                     ph, pw):
    _, bh, bw = img_ref.shape
    area = float(ksize * ksize)              # == self.size == 9
    log_area = math.log(area)

    def local_coord(axis, size, count):
        # Coordinate of a packed pixel within its own image along `axis`.
        idx = lax.broadcasted_iota(jnp.int32, (bh, bw), axis)
        if count == 1:
            return idx
        if (size & (size - 1)) == 0:          # power of two -> cheap AND
            return jnp.bitwise_and(idx, size - 1)
        return lax.rem(idx, size)

    def box_sum(x):
        # 3x3 all-ones conv with per-image replicate padding, as a separable
        # shift-and-add.  pltpu.roll follows the jnp.roll convention:
        # roll(x, 1, axis)[i] == x[i-1].  Seam masks are recomputed per call
        # (cheap VPU iota/compare) instead of being held live across the loop.
        col = local_coord(1, img_w, pw)
        xl = pltpu.roll(x, 1, axis=1)          # previous column
        xr = pltpu.roll(x, bw - 1, axis=1)     # next column
        r = (x + jnp.where(col == 0, x, xl)
               + jnp.where(col == img_w - 1, x, xr))
        row = local_coord(0, img_h, ph)
        ru = pltpu.roll(r, 1, axis=0)          # previous row
        rd = pltpu.roll(r, bh - 1, axis=0)     # next row
        return (r + jnp.where(row == 0, r, ru)
                  + jnp.where(row == img_h - 1, r, rd))

    img = img_ref[0].astype(jnp.float32)

    # Carry (e_cur, u = exp(-e_cur/eps), skel).  Per iteration:
    #   B             = box(u)
    #   erode(e_cur)  = eps*(log(area) - log(B))           -> next e
    #   next u        = exp(-erode/eps) = B/area           (no exp needed)
    #   dilate(erode) = eps*log(box(area/B)) - eps*log(area)
    #                 = eps*log(box(1/B))                  (1 divide + 1 log)
    #   skel         += relu(e_cur - clip(dilate(erode), 0, 1))
    # Iteration 0 reproduces the pre-loop term of the PyTorch forward, the
    # remaining n_iter iterations reproduce the loop body exactly
    # (n_iter + 1 accumulated relu terms in total).
    def body(_, carry):
        e_cur, u, sk = carry
        b = box_sum(u)
        e_nxt = eps * (log_area - jnp.log(b))              # erode(e_cur)
        d = eps * jnp.log(box_sum(1.0 / b))                # dilate(erode(e_cur))
        sk = sk + jnp.maximum(e_cur - jnp.clip(d, 0.0, 1.0), 0.0)
        return e_nxt, b * (1.0 / area), sk

    init = (img, jnp.exp(-img / eps), jnp.zeros_like(img))
    _, _, skel = lax.fori_loop(0, n_iter + 1, body, init)
    skel_ref[0] = skel.astype(skel_ref.dtype)


# ---------------------------------------------------------------------------
# Packing plan: how many images to pack along H (ph) and W (pw) per block.
# ---------------------------------------------------------------------------
def _plan_packing(n, h, w):
    pw_max = 1 if w >= 128 else max(1, 128 // w)    # lane extent <= ~128
    ph_max = 1 if h >= 64 else max(1, 64 // h)      # sublane extent <= ~64

    def plan(slots_cap):
        pw = max(1, min(slots_cap, pw_max))
        ph = max(1, min(_cdiv(slots_cap, pw), ph_max))
        pw = max(1, min(pw, _cdiv(slots_cap, ph)))  # trim zero-padded slots
        return ph, pw

    ph, pw = plan(n)
    g = _cdiv(n, ph * pw)
    # v7x has 2 TensorCores: keep >= 2 "parallel" grid steps, but only when
    # each block still carries >= ~8 f32 vregs of work (splitting a tiny
    # latency-bound block just doubles wall time on single-TC v5e/v6e).
    if g == 1 and n >= 2:
        half = _cdiv(n, 2)
        if half * h * w >= 8 * 1024:
            ph, pw = plan(half)
            g = _cdiv(n, ph * pw)
    return g, ph, pw


# ---------------------------------------------------------------------------
# Wrapper: equivalent of smooth_skeleton(half_size, iter, epsilon).forward(img)
# ---------------------------------------------------------------------------
def smooth_skeleton_forward(img, half_size=1, n_iter=200, epsilon=0.05):
    n, c, h, w = img.shape
    assert c == 1, "the module's 3x3 single-channel kernel implies C == 1"
    # The PyTorch module hard-codes pad=(1,1,1,1), so it is only
    # self-consistent for half_size == 1; keep the same restriction.
    assert half_size == 1
    ksize = 2 * half_size + 1

    x = img.reshape(n, h, w).astype(jnp.float32)

    g, ph, pw = _plan_packing(n, h, w)
    slots = ph * pw
    bh, bw = ph * h, pw * w

    pad = g * slots - n
    if pad:
        x = jnp.concatenate([x, jnp.zeros((pad, h, w), jnp.float32)], axis=0)
    if slots > 1:
        xp = (x.reshape(g, ph, pw, h, w)
               .transpose(0, 1, 3, 2, 4)
               .reshape(g, bh, bw))
    else:
        xp = x.reshape(g, bh, bw)

    iters = n_iter + 1
    elems = g * bh * bw
    cost = pl.CostEstimate(
        flops=int(elems * iters * 40),                 # box adds/selects/scales
        transcendentals=int(elems * (3 * iters + 1)),  # 2 log + 1 div per iter
        bytes_accessed=int(2 * elems * 4),
    )

    out = pl.pallas_call(
        functools.partial(_skeleton_kernel, n_iter=n_iter, eps=float(epsilon),
                          ksize=ksize, img_h=h, img_w=w, ph=ph, pw=pw),
        out_shape=jax.ShapeDtypeStruct((g, bh, bw), jnp.float32),
        grid=(g,),
        in_specs=[pl.BlockSpec((1, bh, bw), lambda i: (i, 0, 0))],
        out_specs=pl.BlockSpec((1, bh, bw), lambda i: (i, 0, 0)),
        compiler_params=pltpu.CompilerParams(
            dimension_semantics=("parallel",)),
        cost_estimate=cost,
    )(xp)

    if slots > 1:
        out = (out.reshape(g, ph, h, pw, w)
                  .transpose(0, 1, 3, 2, 4)
                  .reshape(g * slots, h, w))
    else:
        out = out.reshape(g * slots, h, w)
    return out[:n].reshape(n, c, h, w)


# ---------------------------------------------------------------------------
# Pure-JAX reference (independent formulation) for validation.
# ---------------------------------------------------------------------------
def _smooth_skeleton_reference(img, half_size=1, n_iter=200, epsilon=0.05):
    assert half_size == 1
    x = img[:, 0].astype(jnp.float32)          # (n, h, w)
    log_area = math.log(9.0)

    def box(z):
        zp = jnp.pad(z, ((0, 0), (1, 1), (1, 1)), mode="edge")
        zh = zp[:, :, :-2] + zp[:, :, 1:-1] + zp[:, :, 2:]
        return zh[:, :-2, :] + zh[:, 1:-1, :] + zh[:, 2:, :]

    def smooth_trans(z):
        return epsilon * (jnp.log(box(jnp.exp(z / epsilon))) - log_area)

    def erode(z):
        return -smooth_trans(-z)

    def open_(z):
        return jnp.clip(smooth_trans(erode(z)), 0.0, 1.0)

    skel = jnp.maximum(x - open_(x), 0.0)

    def body(_, carry):
        z, sk = carry
        z = erode(z)
        return z, sk + jnp.maximum(z - open_(z), 0.0)

    _, skel = lax.fori_loop(0, n_iter, body, (x, skel))
    return skel[:, None]


if __name__ == "__main__":
    key = jax.random.PRNGKey(0)
    k1, k2 = jax.random.split(key)
    ref_fn = jax.jit(_smooth_skeleton_reference)

    # Small shape implied by the module (single-channel images).
    img = jax.random.uniform(k1, (2, 1, 16, 16), dtype=jnp.float32)
    skel = smooth_skeleton_forward(img, half_size=1, n_iter=200, epsilon=0.05)
    jax.block_until_ready(skel)
    assert skel.shape == (2, 1, 16, 16) and skel.dtype == jnp.float32
    assert bool(jnp.all(jnp.isfinite(skel)))
    err = float(jnp.max(jnp.abs(skel - ref_fn(img))))
    assert err < 2e-2, f"mismatch vs reference: {err}"

    # Second batch exercises lane+sublane packing (seam masks, padded slots)
    # and the multi-block parallel grid.
    img2 = jax.random.uniform(k2, (40, 1, 16, 16), dtype=jnp.float32)
    skel2 = smooth_skeleton_forward(img2, half_size=1, n_iter=200, epsilon=0.05)
    jax.block_until_ready(skel2)
    assert bool(jnp.all(jnp.isfinite(skel2)))
    err2 = float(jnp.max(jnp.abs(skel2 - ref_fn(img2))))
    assert err2 < 2e-2, f"mismatch vs reference (packed): {err2}"

    print("KERNEL_OK")
</pallas_src>

<mosaic_0001>
module attributes {stable_mosaic.version = 11 : i64} {
  func.func @_skeleton_kernel(%arg0: i32, %arg1: memref<1x16x32xf32, #tpu.memory_space<vmem>>, %arg2: memref<1x16x32xf32, #tpu.memory_space<vmem>>) attributes {dimension_semantics = [#tpu.dimension_semantics<parallel>], iteration_bounds = array<i64: 1>, scalar_prefetch = 0 : i64, scratch_operands = 0 : i64, tpu.core_type = #tpu.core_type<tc>, window_params = [{transform_indices = @transform_0, window_bounds = array<i64: 1, 16, 32>}, {transform_indices = @transform_1, window_bounds = array<i64: 1, 16, 32>}]} {
    %c0 = arith.constant 0 : index
    %c0_0 = arith.constant 0 : index
    %c0_1 = arith.constant 0 : index
    %0 = vector.load %arg1[%c0, %c0_0, %c0_1] : memref<1x16x32xf32, #tpu.memory_space<vmem>>, vector<1x16x32xf32>
    %1 = vector.shape_cast %0 : vector<1x16x32xf32> to vector<16x32xf32>
    %cst = arith.constant 0.000000e+00 : f32
    %2 = vector.broadcast %cst : f32 to vector<16x32xf32>
    %3 = arith.subf %2, %1 : vector<16x32xf32>
    %cst_2 = arith.constant 5.000000e-02 : f32
    %4 = vector.broadcast %cst_2 : f32 to vector<16x32xf32>
    %5 = arith.divf %3, %4 : vector<16x32xf32>
    %6 = math.exp %5 : vector<16x32xf32>
    %cst_3 = arith.constant 0.000000e+00 : f32
    %7 = vector.broadcast %cst_3 : f32 to vector<16x32xf32>
    %c0_i32 = arith.constant 0 : i32
    %c201_i32 = arith.constant 201 : i32
    %8 = arith.addi %c0_i32, %c201_i32 : i32
    %c1_i32 = arith.constant 1 : i32
    %9:3 = scf.for %arg3 = %c0_i32 to %8 step %c1_i32 iter_args(%arg4 = %1, %arg5 = %6, %arg6 = %7) -> (vector<16x32xf32>, vector<16x32xf32>, vector<16x32xf32>)  : i32 {
      %13 = tpu.iota {dimensions = array<i32: 1>} : vector<16x32xi32>
      %c15_i32 = arith.constant 15 : i32
      %14 = vector.broadcast %c15_i32 : i32 to vector<16x32xi32>
      %15 = arith.andi %13, %14 : vector<16x32xi32>
      %c1_i32_7 = arith.constant 1 : i32
      %16 = tpu.dynamic_rotate %arg5 by %c1_i32_7 dim 1 : vector<16x32xf32>, i32 -> vector<16x32xf32>
      %c31_i32 = arith.constant 31 : i32
      %17 = tpu.dynamic_rotate %arg5 by %c31_i32 dim 1 : vector<16x32xf32>, i32 -> vector<16x32xf32>
      %c0_i32_8 = arith.constant 0 : i32
      %18 = vector.broadcast %c0_i32_8 : i32 to vector<16x32xi32>
      %19 = arith.cmpi eq, %15, %18 : vector<16x32xi32>
      %20 = arith.select %19, %arg5, %16 : vector<16x32xi1>, vector<16x32xf32>
      %21 = arith.addf %arg5, %20 : vector<16x32xf32>
      %c15_i32_9 = arith.constant 15 : i32
      %22 = vector.broadcast %c15_i32_9 : i32 to vector<16x32xi32>
      %23 = arith.cmpi eq, %15, %22 : vector<16x32xi32>
      %24 = arith.select %23, %arg5, %17 : vector<16x32xi1>, vector<16x32xf32>
      %25 = arith.addf %21, %24 : vector<16x32xf32>
      %26 = tpu.iota {dimensions = array<i32: 0>} : vector<16x32xi32>
      %c1_i32_10 = arith.constant 1 : i32
      %27 = tpu.dynamic_rotate %25 by %c1_i32_10 dim 0 : vector<16x32xf32>, i32 -> vector<16x32xf32>
      %c15_i32_11 = arith.constant 15 : i32
      %28 = tpu.dynamic_rotate %25 by %c15_i32_11 dim 0 : vector<16x32xf32>, i32 -> vector<16x32xf32>
      %c0_i32_12 = arith.constant 0 : i32
      %29 = vector.broadcast %c0_i32_12 : i32 to vector<16x32xi32>
      %30 = arith.cmpi eq, %26, %29 : vector<16x32xi32>
      %31 = arith.select %30, %25, %27 : vector<16x32xi1>, vector<16x32xf32>
      %32 = arith.addf %25, %31 : vector<16x32xf32>
      %c15_i32_13 = arith.constant 15 : i32
      %33 = vector.broadcast %c15_i32_13 : i32 to vector<16x32xi32>
      %34 = arith.cmpi eq, %26, %33 : vector<16x32xi32>
      %35 = arith.select %34, %25, %28 : vector<16x32xi1>, vector<16x32xf32>
      %36 = arith.addf %32, %35 : vector<16x32xf32>
      %37 = math.log %36 : vector<16x32xf32>
      %cst_14 = arith.constant 2.19722462 : f32
      %38 = vector.broadcast %cst_14 : f32 to vector<16x32xf32>
      %39 = arith.subf %38, %37 : vector<16x32xf32>
      %cst_15 = arith.constant 5.000000e-02 : f32
      %40 = vector.broadcast %cst_15 : f32 to vector<16x32xf32>
      %41 = arith.mulf %40, %39 : vector<16x32xf32>
      %cst_16 = arith.constant 1.000000e+00 : f32
      %42 = vector.broadcast %cst_16 : f32 to vector<16x32xf32>
      %43 = arith.divf %42, %36 : vector<16x32xf32>
      %44 = tpu.iota {dimensions = array<i32: 1>} : vector<16x32xi32>
      %c15_i32_17 = arith.constant 15 : i32
      %45 = vector.broadcast %c15_i32_17 : i32 to vector<16x32xi32>
      %46 = arith.andi %44, %45 : vector<16x32xi32>
      %c1_i32_18 = arith.constant 1 : i32
      %47 = tpu.dynamic_rotate %43 by %c1_i32_18 dim 1 : vector<16x32xf32>, i32 -> vector<16x32xf32>
      %c31_i32_19 = arith.constant 31 : i32
      %48 = tpu.dynamic_rotate %43 by %c31_i32_19 dim 1 : vector<16x32xf32>, i32 -> vector<16x32xf32>
      %c0_i32_20 = arith.constant 0 : i32
      %49 = vector.broadcast %c0_i32_20 : i32 to vector<16x32xi32>
      %50 = arith.cmpi eq, %46, %49 : vector<16x32xi32>
      %51 = arith.select %50, %43, %47 : vector<16x32xi1>, vector<16x32xf32>
      %52 = arith.addf %43, %51 : vector<16x32xf32>
      %c15_i32_21 = arith.constant 15 : i32
      %53 = vector.broadcast %c15_i32_21 : i32 to vector<16x32xi32>
      %54 = arith.cmpi eq, %46, %53 : vector<16x32xi32>
      %55 = arith.select %54, %43, %48 : vector<16x32xi1>, vector<16x32xf32>
      %56 = arith.addf %52, %55 : vector<16x32xf32>
      %57 = tpu.iota {dimensions = array<i32: 0>} : vector<16x32xi32>
      %c1_i32_22 = arith.constant 1 : i32
      %58 = tpu.dynamic_rotate %56 by %c1_i32_22 dim 0 : vector<16x32xf32>, i32 -> vector<16x32xf32>
      %c15_i32_23 = arith.constant 15 : i32
      %59 = tpu.dynamic_rotate %56 by %c15_i32_23 dim 0 : vector<16x32xf32>, i32 -> vector<16x32xf32>
      %c0_i32_24 = arith.constant 0 : i32
      %60 = vector.broadcast %c0_i32_24 : i32 to vector<16x32xi32>
      %61 = arith.cmpi eq, %57, %60 : vector<16x32xi32>
      %62 = arith.select %61, %56, %58 : vector<16x32xi1>, vector<16x32xf32>
      %63 = arith.addf %56, %62 : vector<16x32xf32>
      %c15_i32_25 = arith.constant 15 : i32
      %64 = vector.broadcast %c15_i32_25 : i32 to vector<16x32xi32>
      %65 = arith.cmpi eq, %57, %64 : vector<16x32xi32>
      %66 = arith.select %65, %56, %59 : vector<16x32xi1>, vector<16x32xf32>
      %67 = arith.addf %63, %66 : vector<16x32xf32>
      %68 = math.log %67 : vector<16x32xf32>
      %cst_26 = arith.constant 5.000000e-02 : f32
      %69 = vector.broadcast %cst_26 : f32 to vector<16x32xf32>
      %70 = arith.mulf %69, %68 : vector<16x32xf32>
      %cst_27 = arith.constant 0.000000e+00 : f32
      %cst_28 = arith.constant 1.000000e+00 : f32
      %71 = vector.broadcast %cst_27 : f32 to vector<16x32xf32>
      %72 = arith.maximumf %71, %70 : vector<16x32xf32>
      %73 = vector.broadcast %cst_28 : f32 to vector<16x32xf32>
      %74 = arith.minimumf %73, %72 : vector<16x32xf32>
      %75 = arith.subf %arg4, %74 : vector<16x32xf32>
      %cst_29 = arith.constant 0.000000e+00 : f32
      %76 = vector.broadcast %cst_29 : f32 to vector<16x32xf32>
      %77 = arith.maximumf %75, %76 : vector<16x32xf32>
      %78 = arith.addf %arg6, %77 : vector<16x32xf32>
      %cst_30 = arith.constant 0.111111112 : f32
      %79 = vector.broadcast %cst_30 : f32 to vector<16x32xf32>
      %80 = arith.mulf %36, %79 : vector<16x32xf32>
      scf.yield %41, %80, %78 : vector<16x32xf32>, vector<16x32xf32>, vector<16x32xf32>
    }
    %c0_4 = arith.constant 0 : index
    %c0_5 = arith.constant 0 : index
    %c0_6 = arith.constant 0 : index
    %10 = vector.load %arg2[%c0_4, %c0_5, %c0_6] : memref<1x16x32xf32, #tpu.memory_space<vmem>>, vector<1x16x32xf32>
    %11 = vector.shape_cast %10 : vector<1x16x32xf32> to vector<16x32xf32>
    %12 = vector.shape_cast %9#2 : vector<16x32xf32> to vector<1x16x32xf32>
    tpu.vector_store %arg2[%c0_4, %c0_5, %c0_6], %12 {strides = array<i32>} : memref<1x16x32xf32, #tpu.memory_space<vmem>>, vector<1x16x32xf32>,
    return
  }
  func.func @transform_0(%arg0: i32) -> (i32, i32, i32) {
    %c0_i32 = arith.constant 0 : i32
    %c0_i32_0 = arith.constant 0 : i32
    %c0_i32_1 = arith.constant 0 : i32
    return %arg0, %c0_i32, %c0_i32_0 : i32, i32, i32
  }
  func.func @transform_1(%arg0: i32) -> (i32, i32, i32) {
    %c0_i32 = arith.constant 0 : i32
    %c0_i32_0 = arith.constant 0 : i32
    %c0_i32_1 = arith.constant 0 : i32
    return %arg0, %c0_i32, %c0_i32_0 : i32, i32, i32
  }
}

</mosaic_0001>

<llo_original>
// kernel: tpu_custom_call.1
$region0: #{tpu_custom_call.1}
  #allocation0 [shape = 'u32[]', space=smem, size = 0x4, offset = 0x4, fixed_abs, tag = 'smem constant byte address 0x4 - core index']
  #allocation1 [shape = 'u32[144,128]{1,0:T(1,128)}', space=vmem, size = 0x12000, scoped, tag = 'internal scratch']
  %s0 = inlined_call_operand.hbm [shape: f32[1,16,32], index: 0, kind: input, shape index: {}]
  %s1 = inlined_call_operand.hbm [shape: f32[1,16,32], index: 1, kind: output, shape index: {}]
  %s2 = sld [smem:[#allocation0]]
  $region25: #{tpu_custom_call.1} parent=0
    _
  %s4 = ssub.s32 1, %s2
  %s5 = scalar_select 0, %s4, %s2
  $region1: #{tpu_custom_call.1} parent=0
    #allocation2 [shape = 'u8[8192]{0}', space=vmem, size = 0x2000, scoped, tag = 'input window, operand 0, single buffered']
    #allocation3 [shape = 's32[1]{0}', space=sflag, size = 0x4, scoped, tag = 'scoped memory for tpu_custom_call.1']
    #allocation4 [shape = 's32[1]{0}', space=sflag, size = 0x4, scoped, tag = 'scoped memory for tpu_custom_call.1']
    #allocation5 [shape = 'u8[8192]{0}', space=vmem, size = 0x2000, scoped, tag = 'output window, operand 0, single buffered']
    %6 = vsyncpa [#allocation3], 0
    %7 = vsyncpa [#allocation4], 0
    // Predicated region
    $region2: #{tpu_custom_call.1} parent=1 // pred_check
      _
    $region3: #{tpu_custom_call.1} parent=1 // pred_check_branch
      %9 = sbr.rel (0) target = $region5
    $region4: #{tpu_custom_call.1} parent=1 // pred_region
      %s11 = ssub.s32 256, 256
      %12 = vsyncadd [#allocation3], %s11
      %s13 = sshll.u32 [#allocation2], 4
      %s14 = int_to_ptr.vmem [resolvable:$true] %s13
      %19 = dma.hbm_to_vmem [thread:$0]  %s0, 256, %s14, [#allocation3], 128, 128, 8
    $region5: #{tpu_custom_call.1} parent=1 // pred_fallthru
      _
    // Predicated region
    $region6: #{tpu_custom_call.1} parent=1 // pred_check
      _
    $region7: #{tpu_custom_call.1} parent=1 // pred_check_branch
      %21 = sbr.rel (0) target = $region9
    $region8: #{tpu_custom_call.1} parent=1 // pred_region
      %22 = dma.done [#allocation3], 256
    $region9: #{tpu_custom_call.1} parent=1 // pred_fallthru
      _
    %v23 = vld [vmem:[#allocation2] sm:$0xff]
    %v24 = vld [vmem:[#allocation2 + $0x8] sm:$0xff]
    %v25 = vsub.f32 0.0, %v23
    %v26 = vsub.f32 0.0, %v24
    %v27 = vrcp.pop 0.05
    %v28 = vmul.f32 %v25, %v27
    %v29 = vmul.f32 %v26, %v27
    %v30 = vmul.f32 %v28, 1.442695
    %v31 = vpow.pop %v30
    %v32 = vmul.f32 %v29, 1.442695
    %v33 = vpow.pop %v32
    loop: start=0, step=1, limit=201
    $region10: #{tpu_custom_call.1} parent=1 // loop_pre_header
      _
    $region11: #{tpu_custom_call.1} parent=1 // loop_header
      %s35 = sphi 0, %s39
      %p36 = scmp.ge.s32.totalorder %s35, 201
      %v40 = vphi %v23, %v117
      %v41 = vphi %v24, %v118
      %v42 = vphi %v31, %v189
      %v43 = vphi %v33, %v190
      %v44 = vphi 0.0, %v187
      %v45 = vphi 0.0, %v188
    $region12: #{tpu_custom_call.1} parent=1 // loop_header_branch
      %38 = sbr.rel (%p36) target = $region16
    $region13: #{tpu_custom_call.1} parent=1 // loop_body
      %v46 = vlaneseq
      %v47 = vand.u32 %v46, 127
      %v48 = vand.u32 %v47, 15
      %vm49 = vcmask 1047808
      %50 = vrot.lane.b32.xlu0 %v42, 32
      %v51 = vpop.permute.xlu0 %50
      %v52 = vsel %vm49, %v51, %v42
      %53 = vrot.lane.b32.xlu0 %v43, 32
      %v54 = vpop.permute.xlu0 %53
      %v55 = vsel %vm49, %v54, %v43
      %56 = vrot.lane.b32.xlu0 %v52, 32
      %v57 = vpop.permute.xlu0 %56
      %58 = vrot.lane.b32.xlu0 %v55, 32
      %v59 = vpop.permute.xlu0 %58
      %v60 = vsel %vm49, %v57, %v42
      %v61 = vsel %vm49, %v59, %v43
      %vm62 = vcmp.eq.s32.totalorder %v48, 0
      %65 = vrot.lane.b32.xlu0 %v60, 97
      %v66 = vpop.permute.xlu0 %65
      %67 = vrot.lane.b32.xlu0 %v61, 97
      %v68 = vpop.permute.xlu0 %67
      %v71 = vsel %vm62, %v42, %v66
      %v72 = vsel %vm62, %v43, %v68
      %v73 = vadd.f32 %v42, %v71
      %v74 = vadd.f32 %v43, %v72
      %vm75 = vcmp.eq.s32.totalorder %v48, 15
      %76 = vrot.lane.b32.xlu0 %v60, 127
      %v77 = vpop.permute.xlu0 %76
      %78 = vrot.lane.b32.xlu0 %v61, 127
      %v79 = vpop.permute.xlu0 %78
      %v82 = vsel %vm75, %v42, %v77
      %v83 = vsel %vm75, %v43, %v79
      %v84 = vadd.f32 %v73, %v82
      %v85 = vadd.f32 %v74, %v83
      %v86 = vlaneseq
      %v87 = vshrl.u32 %v86, 7
      %v88 = vadd.s32 %v87, 8
      %v89 = vrot.slane %v84, 7
      %v90 = vrot.slane %v85, 7
      %vm91 = vcmp.lt.s32.totalorder %v87, 1
      %v92 = vsel %vm91, %v89, %v90
      %v93 = vsel %vm91, %v90, %v89
      %v94 = vrot.slane %v84, 1
      %v95 = vrot.slane %v85, 1
      %vm96 = vcmp.lt.s32.totalorder %v87, 7
      %v97 = vsel %vm96, %v94, %v95
      %v98 = vsel %vm96, %v95, %v94
      %vm99 = vcmp.eq.s32.totalorder %v87, 0
      %vm100 = vcmp.eq.s32.totalorder %v88, 0
      %v101 = vsel %vm99, %v84, %v93
      %v102 = vsel %vm100, %v85, %v92
      %v103 = vadd.f32 %v84, %v101
      %v104 = vadd.f32 %v85, %v102
      %vm105 = vcmp.eq.s32.totalorder %v87, 15
      %vm106 = vcmp.eq.s32.totalorder %v88, 15
      %v107 = vsel %vm105, %v84, %v97
      %v108 = vsel %vm106, %v85, %v98
      %v109 = vadd.f32 %v103, %v107
      %v110 = vadd.f32 %v104, %v108
      %v111 = vlog2.pop %v109
      %v112 = vmul.f32 %v111, 0.6931472
      %v113 = vlog2.pop %v110
      %v114 = vmul.f32 %v113, 0.6931472
      %v115 = vsub.f32 2.1972246, %v112
      %v116 = vsub.f32 2.1972246, %v114
      %v117 = vmul.f32 %v115, 0.05
      %v118 = vmul.f32 %v116, 0.05
      %v119 = vrcp.pop %v109
      %v120 = vmul.f32 1.0, %v119
      %v121 = vrcp.pop %v110
      %v122 = vmul.f32 1.0, %v121
      %123 = vrot.lane.b32.xlu0 %v120, 32
      %v124 = vpop.permute.xlu0 %123
      %v125 = vsel %vm49, %v124, %v120
      %126 = vrot.lane.b32.xlu0 %v122, 32
      %v127 = vpop.permute.xlu0 %126
      %v128 = vsel %vm49, %v127, %v122
      %129 = vrot.lane.b32.xlu0 %v125, 32
      %v130 = vpop.permute.xlu0 %129
      %131 = vrot.lane.b32.xlu0 %v128, 32
      %v132 = vpop.permute.xlu0 %131
      %v133 = vsel %vm49, %v130, %v120
      %v134 = vsel %vm49, %v132, %v122
      %137 = vrot.lane.b32.xlu0 %v133, 97
      %v138 = vpop.permute.xlu0 %137
      %139 = vrot.lane.b32.xlu0 %v134, 97
      %v140 = vpop.permute.xlu0 %139
      %v143 = vsel %vm62, %v120, %v138
      %v144 = vsel %vm62, %v122, %v140
      %v145 = vadd.f32 %v120, %v143
      %v146 = vadd.f32 %v122, %v144
      %147 = vrot.lane.b32.xlu0 %v133, 127
      %v148 = vpop.permute.xlu0 %147
      %149 = vrot.lane.b32.xlu0 %v134, 127
      %v150 = vpop.permute.xlu0 %149
      %v153 = vsel %vm75, %v120, %v148
      %v154 = vsel %vm75, %v122, %v150
      %v155 = vadd.f32 %v145, %v153
      %v156 = vadd.f32 %v146, %v154
      %v157 = vrot.slane %v155, 7
      %v158 = vrot.slane %v156, 7
      %v159 = vsel %vm91, %v157, %v158
      %v160 = vsel %vm91, %v158, %v157
      %v161 = vrot.slane %v155, 1
      %v162 = vrot.slane %v156, 1
      %v163 = vsel %vm96, %v161, %v162
      %v164 = vsel %vm96, %v162, %v161
      %v165 = vsel %vm99, %v155, %v160
      %v166 = vsel %vm100, %v156, %v159
      %v167 = vadd.f32 %v155, %v165
      %v168 = vadd.f32 %v156, %v166
      %v169 = vsel %vm105, %v155, %v163
      %v170 = vsel %vm106, %v156, %v164
      %v171 = vadd.f32 %v167, %v169
      %v172 = vadd.f32 %v168, %v170
      %v173 = vlog2.pop %v171
      %v174 = vmul.f32 %v173, 0.6931472
      %v175 = vlog2.pop %v172
      %v176 = vmul.f32 %v175, 0.6931472
      %v177 = vmul.f32 %v174, 0.05
      %v178 = vmul.f32 %v176, 0.05
      %v179 = vmax.f32 %v177, 0.0
      %v180 = vmax.f32 %v178, 0.0
      %v181 = vmin.f32 %v179, 1.0
      %v182 = vmin.f32 %v180, 1.0
      %v183 = vsub.f32 %v40, %v181
      %v184 = vsub.f32 %v41, %v182
      %v185 = vmax.f32 %v183, 0.0
      %v186 = vmax.f32 %v184, 0.0
      %v187 = vadd.f32 %v44, %v185
      %v188 = vadd.f32 %v45, %v186
      %v189 = vmul.f32 %v109, 0.11111111
      %v190 = vmul.f32 %v110, 0.11111111
    $region14: #{tpu_custom_call.1} parent=1 // loop_footer
      %s39 = sadd.s32 1, %s35
    $region15: #{tpu_custom_call.1} parent=1 // loop_footer_branch
      %34 = sbr.rel target = $region11
    $region16: #{tpu_custom_call.1} parent=1 // loop_exit
      _
    %vm191 = vcmask 261120
    %192 = vst.msk [vmem:[#allocation5] sm:$0xff] %vm191, %v44
    %193 = vst.msk [vmem:[#allocation5 + $0x8] sm:$0xff] %vm191, %v45
    // Predicated region
    $region17: #{tpu_custom_call.1} parent=1 // pred_check
      _
    $region18: #{tpu_custom_call.1} parent=1 // pred_check_branch
      %195 = sbr.rel (0) target = $region20
    $region19: #{tpu_custom_call.1} parent=1 // pred_region
      %s197 = ssub.s32 256, 256
      %198 = vsyncadd [#allocation4], %s197
      %s199 = sshll.u32 [#allocation5], 4
      %s200 = int_to_ptr.vmem [resolvable:$true] %s199
      %205 = dma.vmem_to_hbm [thread:$0]  %s200, 256, %s1, [#allocation4], 128, 128, 8
    $region20: #{tpu_custom_call.1} parent=1 // pred_fallthru
      _
    // Predicated region
    $region21: #{tpu_custom_call.1} parent=1 // pred_check
      _
    $region22: #{tpu_custom_call.1} parent=1 // pred_check_branch
      %207 = sbr.rel (0) target = $region24
    $region23: #{tpu_custom_call.1} parent=1 // pred_region
      %208 = dma.done [#allocation4], 256
    $region24: #{tpu_custom_call.1} parent=1 // pred_fallthru
      _
    %209 = vsyncpa [#allocation3], 1
    %210 = vsyncpa [#allocation4], 1

</llo_original>
